<compile_context>
chip_gen: v7x
topology: tpu7x:2x2x1
jax: 0.10.0
libtpu: 0.0.40
codegen_flags: <defaults>
</compile_context>

<pallas_src>
import math

import jax
import jax.numpy as jnp
from jax.experimental import pallas as pl
from jax.experimental.pallas import tpu as pltpu


def _round_up(x, m):
    return (x + m - 1) // m * m


# ---------------------------------------------------------------------------
# Kernel A: support = x @ W   (tiled over node rows; W stays resident in VMEM)
# ---------------------------------------------------------------------------
def _support_kernel(x_ref, w_ref, s_ref):
    s_ref[...] = jnp.dot(
        x_ref[...], w_ref[...], preferred_element_type=jnp.float32
    ).astype(s_ref.dtype)


# ---------------------------------------------------------------------------
# Kernel B: out = adj @ support + bias
#   grid = (adj row tiles : "parallel", contraction tiles over N : "arbitrary")
#   f32 VMEM accumulator; bias added only at the last contraction step.
# ---------------------------------------------------------------------------
def _aggregate_kernel(adj_ref, s_ref, b_ref, out_ref, acc_ref):
    k = pl.program_id(1)

    @pl.when(k == 0)
    def _():
        acc_ref[...] = jnp.zeros_like(acc_ref)

    acc_ref[...] += jnp.dot(
        adj_ref[...], s_ref[...], preferred_element_type=jnp.float32
    )

    @pl.when(k == pl.num_programs(1) - 1)
    def _():
        out_ref[...] = (acc_ref[...] + b_ref[...]).astype(out_ref.dtype)


def graph_convolution(x, adj, weight, bias=None, *,
                      block_m=256, block_k=256,
                      compute_dtype=jnp.float32):
    """Pallas GCN layer: adj @ (x @ weight) + bias.

    compute_dtype: dtype of the adj / x / weight streams fed to the MXU
    (f32 accumulation either way).  Use jnp.bfloat16 for large graphs on
    v6e/v7x — the adjacency DMA is the bandwidth bottleneck.
    """
    n, f_in = x.shape
    f_out = weight.shape[1]
    cdt = jnp.dtype(compute_dtype)

    # Lane-dense padding: last dims up to multiples of 128 so stores are
    # unmasked `vst` and the MXU result columns are fully used.
    f_in_p = _round_up(f_in, 128)
    f_out_p = _round_up(f_out, 128)

    # Row / contraction tiles.  256x256 f32/bf16 tiles (double-buffered) stay
    # well under the default scoped-VMEM limit on v5e/v6e/v7x — do NOT size
    # for 128 MiB; v7x only has 64 MiB per TensorCore.
    tm = min(block_m, _round_up(n, 8))      # adj row tile   (sublane axis, /8)
    tk = min(block_k, _round_up(n, 128))    # contraction tile (lane axis, /128)
    n_rows_p = _round_up(n, tm)
    n_k_p = _round_up(n, tk)

    # Zero-padding is exact: padded adj rows/cols and padded feature columns
    # contribute 0, and the result is sliced back to (n, f_out).
    x_p = jnp.zeros((n_k_p, f_in_p), cdt).at[:n, :f_in].set(x.astype(cdt))
    w_p = jnp.zeros((f_in_p, f_out_p), cdt).at[:f_in, :f_out].set(
        weight.astype(cdt))
    adj_p = jnp.zeros((n_rows_p, n_k_p), cdt).at[:n, :n].set(adj.astype(cdt))
    b_p = jnp.zeros((1, f_out_p), jnp.float32)
    if bias is not None:
        b_p = b_p.at[0, :f_out].set(bias.astype(jnp.float32).reshape(f_out))

    isz = cdt.itemsize

    # ---- pass A: support = x @ W -----------------------------------------
    # TODO(synk): for very large F_in, tile the contraction here too; typical
    # GCN feature widths fit a resident (F_in, F_out) weight block.
    support = pl.pallas_call(
        _support_kernel,
        out_shape=jax.ShapeDtypeStruct((n_k_p, f_out_p), cdt),
        grid_spec=pltpu.PrefetchScalarGridSpec(
            num_scalar_prefetch=0,
            grid=(n_k_p // tk,),
            in_specs=[
                pl.BlockSpec((tk, f_in_p), lambda i: (i, 0)),       # x rows
                pl.BlockSpec((f_in_p, f_out_p), lambda i: (0, 0)),  # W resident
            ],
            out_specs=pl.BlockSpec((tk, f_out_p), lambda i: (i, 0)),
        ),
        compiler_params=pltpu.CompilerParams(
            dimension_semantics=("parallel",)),
        cost_estimate=pl.CostEstimate(
            flops=2 * n_k_p * f_in_p * f_out_p,
            transcendentals=0,
            bytes_accessed=(n_k_p * f_in_p + f_in_p * f_out_p
                            + n_k_p * f_out_p) * isz),
    )(x_p, w_p)

    # ---- pass B: out = adj @ support + bias -------------------------------
    out_p = pl.pallas_call(
        _aggregate_kernel,
        out_shape=jax.ShapeDtypeStruct((n_rows_p, f_out_p), jnp.float32),
        grid_spec=pltpu.PrefetchScalarGridSpec(
            num_scalar_prefetch=0,
            grid=(n_rows_p // tm, n_k_p // tk),
            in_specs=[
                pl.BlockSpec((tm, tk), lambda i, k: (i, k)),        # adj tile
                pl.BlockSpec((tk, f_out_p), lambda i, k: (k, 0)),   # support
                pl.BlockSpec((1, f_out_p), lambda i, k: (0, 0)),    # bias resident
            ],
            out_specs=pl.BlockSpec((tm, f_out_p), lambda i, k: (i, 0)),
            scratch_shapes=[pltpu.VMEM((tm, f_out_p), jnp.float32)],
        ),
        compiler_params=pltpu.CompilerParams(
            dimension_semantics=("parallel", "arbitrary")),
        cost_estimate=pl.CostEstimate(
            flops=2 * n_rows_p * n_k_p * f_out_p,
            transcendentals=0,
            bytes_accessed=(n_rows_p * n_k_p * isz
                            + n_k_p * f_out_p * isz
                            + n_rows_p * f_out_p * 4)),
    )(adj_p, support, b_p)

    return out_p[:n, :f_out]


if __name__ == "__main__":
    # Small synthetic problem: N=64 graph nodes, 32 input features,
    # 32 output features.  (At this size launch overhead dominates; the
    # tiling above is for realistic N in the thousands.)
    N, F_IN, F_OUT = 64, 32, 32

    key = jax.random.PRNGKey(0)
    k_x, k_adj, k_w, k_b = jax.random.split(key, 4)

    # Node features.
    x = jax.random.normal(k_x, (N, F_IN), dtype=jnp.float32)

    # Row-normalized dense adjacency (torch.spmm's sparse adj, densified).
    a_raw = (jax.random.uniform(k_adj, (N, N)) < 0.1).astype(jnp.float32)
    a_sym = jnp.maximum(a_raw, a_raw.T) + jnp.eye(N, dtype=jnp.float32)
    deg = jnp.sum(a_sym, axis=1, keepdims=True)
    adj = a_sym / deg

    # Parameter init matching reset_parameters(): uniform(-stdv, stdv),
    # stdv = 1/sqrt(out_features).
    stdv = 1.0 / math.sqrt(F_OUT)
    weight = jax.random.uniform(
        k_w, (F_IN, F_OUT), minval=-stdv, maxval=stdv, dtype=jnp.float32)
    bias = jax.random.uniform(
        k_b, (F_OUT,), minval=-stdv, maxval=stdv, dtype=jnp.float32)

    # Plain-JAX reference (same semantics as the torch forward).
    ref = adj @ (x @ weight) + bias

    # f32 path: matches the reference tightly.
    out = jax.block_until_ready(
        graph_convolution(x, adj, weight, bias, compute_dtype=jnp.float32))
    assert out.shape == (N, F_OUT)
    assert jnp.allclose(out, ref, atol=1e-4, rtol=1e-4)

    # bf16 adjacency/feature stream (production path on v6e/v7x — the adj DMA
    # is the bandwidth bottleneck; f32 accumulation keeps error small).
    out_bf16 = jax.block_until_ready(
        graph_convolution(x, adj, weight, bias, compute_dtype=jnp.bfloat16))
    assert out_bf16.shape == (N, F_OUT)
    assert jnp.allclose(out_bf16, ref, atol=5e-2, rtol=5e-2)

    print("KERNEL_OK")
</pallas_src>

<mosaic_0001>
module attributes {stable_mosaic.version = 11 : i64} {
  func.func @_support_kernel(%arg0: i32, %arg1: memref<128x128xf32, #tpu.memory_space<vmem>>, %arg2: memref<128x128xf32, #tpu.memory_space<vmem>>, %arg3: memref<128x128xf32, #tpu.memory_space<vmem>>) attributes {dimension_semantics = [#tpu.dimension_semantics<parallel>], iteration_bounds = array<i64: 1>, scalar_prefetch = 0 : i64, scratch_operands = 0 : i64, tpu.core_type = #tpu.core_type<tc>, window_params = [{transform_indices = @transform_0, window_bounds = array<i64: 128, 128>}, {pipeline_mode = #tpu.pipeline_mode<synchronous>, transform_indices = @transform_1, window_bounds = array<i64: 128, 128>}, {transform_indices = @transform_2, window_bounds = array<i64: 128, 128>}]} {
    %c0 = arith.constant 0 : index
    %c0_0 = arith.constant 0 : index
    %0 = vector.load %arg1[%c0, %c0_0] : memref<128x128xf32, #tpu.memory_space<vmem>>, vector<128x128xf32>
    %c0_1 = arith.constant 0 : index
    %c0_2 = arith.constant 0 : index
    %1 = vector.load %arg2[%c0_1, %c0_2] : memref<128x128xf32, #tpu.memory_space<vmem>>, vector<128x128xf32>
    %cst = arith.constant dense<0.000000e+00> : vector<128x128xf32>
    %2 = tpu.matmul %0, %1, %cst {dimension_numbers = #tpu.dot_dimension_numbers<[1], [0], [0], [1], [0, 0, 1, 1], [], []>} : vector<128x128xf32>, vector<128x128xf32>, vector<128x128xf32> -> vector<128x128xf32>
    %c0_3 = arith.constant 0 : index
    %c0_4 = arith.constant 0 : index
    %3 = vector.load %arg3[%c0_3, %c0_4] : memref<128x128xf32, #tpu.memory_space<vmem>>, vector<128x128xf32>
    tpu.vector_store %arg3[%c0_3, %c0_4], %2 {strides = array<i32>} : memref<128x128xf32, #tpu.memory_space<vmem>>, vector<128x128xf32>,
    return
  }
  func.func @transform_0(%arg0: i32) -> (i32, i32) {
    %c0_i32 = arith.constant 0 : i32
    %c0_i32_0 = arith.constant 0 : i32
    return %arg0, %c0_i32 : i32, i32
  }
  func.func @transform_1(%arg0: i32) -> (i32, i32) {
    %c0_i32 = arith.constant 0 : i32
    %c0_i32_0 = arith.constant 0 : i32
    %c0_i32_1 = arith.constant 0 : i32
    return %c0_i32, %c0_i32_0 : i32, i32
  }
  func.func @transform_2(%arg0: i32) -> (i32, i32) {
    %c0_i32 = arith.constant 0 : i32
    %c0_i32_0 = arith.constant 0 : i32
    return %arg0, %c0_i32 : i32, i32
  }
}

</mosaic_0001>

<llo_original>
// kernel: tpu_custom_call.1
$region0: #{tpu_custom_call.1}
  #allocation0 [shape = 'u32[]', space=smem, size = 0x4, offset = 0x4, fixed_abs, tag = 'smem constant byte address 0x4 - core index']
  #allocation1 [shape = 'u32[144,128]{1,0:T(1,128)}', space=vmem, size = 0x12000, scoped, tag = 'internal scratch']
  %s0 = inlined_call_operand.hbm [shape: f32[128,128], index: 0, kind: input, shape index: {}]
  %s1 = inlined_call_operand.hbm [shape: f32[128,128], index: 1, kind: input, shape index: {}]
  %s2 = inlined_call_operand.hbm [shape: f32[128,128], index: 2, kind: output, shape index: {}]
  %s3 = sld [smem:[#allocation0]]
  $region26: #{tpu_custom_call.1} parent=0
    _
  %s5 = ssub.s32 1, %s3
  %s6 = scalar_select 0, %s5, %s3
  $region1: #{tpu_custom_call.1} parent=0
    #allocation2 [shape = 'u8[65536]{0}', space=vmem, size = 0x10000, scoped, tag = 'input window, operand 0, single buffered']
    #allocation3 [shape = 's32[1]{0}', space=sflag, size = 0x4, scoped, tag = 'scoped memory for tpu_custom_call.1']
    #allocation4 [shape = 's32[1]{0}', space=sflag, size = 0x4, scoped, tag = 'scoped memory for tpu_custom_call.1']
    #allocation5 [shape = 'u8[65536]{0}', space=vmem, size = 0x10000, scoped, tag = 'input window, operand 1, single buffered']
    #allocation6 [shape = 's32[1]{0}', space=sflag, size = 0x4, scoped, tag = 'scoped memory for tpu_custom_call.1']
    #allocation7 [shape = 'u8[65536]{0}', space=vmem, size = 0x10000, scoped, tag = 'output window, operand 0, single buffered']
    %7 = vsyncpa [#allocation3], 0
    %8 = vsyncpa [#allocation6], 0
    %9 = vsyncpa [#allocation4], 0
    // Predicated region
    $region2: #{tpu_custom_call.1} parent=1 // pred_check
      _
    $region3: #{tpu_custom_call.1} parent=1 // pred_check_branch
      %11 = sbr.rel (0) target = $region5
    $region4: #{tpu_custom_call.1} parent=1 // pred_region
      %s13 = ssub.s32 2048, 2048
      %14 = vsyncadd [#allocation3], %s13
      %s15 = sshll.u32 [#allocation2], 4
      %s16 = int_to_ptr.vmem [resolvable:$true] %s15
      %21 = dma.hbm_to_vmem [thread:$0]  %s0, 2048, %s16, [#allocation3], 128, 128, 8
    $region5: #{tpu_custom_call.1} parent=1 // pred_fallthru
      _
    // Predicated region
    $region6: #{tpu_custom_call.1} parent=1 // pred_check
      _
    $region7: #{tpu_custom_call.1} parent=1 // pred_check_branch
      %23 = sbr.rel (0) target = $region9
    $region8: #{tpu_custom_call.1} parent=1 // pred_region
      %s25 = ssub.s32 2048, 2048
      %26 = vsyncadd [#allocation6], %s25
      %s27 = sshll.u32 [#allocation5], 4
      %s28 = int_to_ptr.vmem [resolvable:$true] %s27
      %33 = dma.hbm_to_vmem [thread:$0]  %s1, 2048, %s28, [#allocation6], 128, 128, 8
    $region9: #{tpu_custom_call.1} parent=1 // pred_fallthru
      _
    // Predicated region
    $region10: #{tpu_custom_call.1} parent=1 // pred_check
      _
    $region11: #{tpu_custom_call.1} parent=1 // pred_check_branch
      %35 = sbr.rel (0) target = $region13
    $region12: #{tpu_custom_call.1} parent=1 // pred_region
      %36 = dma.done [#allocation3], 2048
    $region13: #{tpu_custom_call.1} parent=1 // pred_fallthru
      _
    // Predicated region
    $region14: #{tpu_custom_call.1} parent=1 // pred_check
      _
    $region15: #{tpu_custom_call.1} parent=1 // pred_check_branch
      %38 = sbr.rel (0) target = $region17
    $region16: #{tpu_custom_call.1} parent=1 // pred_region
      %39 = dma.done [#allocation6], 2048
    $region17: #{tpu_custom_call.1} parent=1 // pred_fallthru
      _
    %v40 = vld [vmem:[#allocation2] sm:$0xff]
    %v41 = vld [vmem:[#allocation2 + $0x8] sm:$0xff]
    %v42 = vld [vmem:[#allocation2 + $0x10] sm:$0xff]
    %v43 = vld [vmem:[#allocation2 + $0x18] sm:$0xff]
    %v44 = vld [vmem:[#allocation2 + $0x20] sm:$0xff]
    %v45 = vld [vmem:[#allocation2 + $0x28] sm:$0xff]
    %v46 = vld [vmem:[#allocation2 + $0x30] sm:$0xff]
    %v47 = vld [vmem:[#allocation2 + $0x38] sm:$0xff]
    %v48 = vld [vmem:[#allocation2 + $0x40] sm:$0xff]
    %v49 = vld [vmem:[#allocation2 + $0x48] sm:$0xff]
    %v50 = vld [vmem:[#allocation2 + $0x50] sm:$0xff]
    %v51 = vld [vmem:[#allocation2 + $0x58] sm:$0xff]
    %v52 = vld [vmem:[#allocation2 + $0x60] sm:$0xff]
    %v53 = vld [vmem:[#allocation2 + $0x68] sm:$0xff]
    %v54 = vld [vmem:[#allocation2 + $0x70] sm:$0xff]
    %v55 = vld [vmem:[#allocation2 + $0x78] sm:$0xff]
    %v56 = vld [vmem:[#allocation5] sm:$0xff]
    %v57 = vld [vmem:[#allocation5 + $0x8] sm:$0xff]
    %v58 = vld [vmem:[#allocation5 + $0x10] sm:$0xff]
    %v59 = vld [vmem:[#allocation5 + $0x18] sm:$0xff]
    %v60 = vld [vmem:[#allocation5 + $0x20] sm:$0xff]
    %v61 = vld [vmem:[#allocation5 + $0x28] sm:$0xff]
    %v62 = vld [vmem:[#allocation5 + $0x30] sm:$0xff]
    %v63 = vld [vmem:[#allocation5 + $0x38] sm:$0xff]
    %v64 = vld [vmem:[#allocation5 + $0x40] sm:$0xff]
    %v65 = vld [vmem:[#allocation5 + $0x48] sm:$0xff]
    %v66 = vld [vmem:[#allocation5 + $0x50] sm:$0xff]
    %v67 = vld [vmem:[#allocation5 + $0x58] sm:$0xff]
    %v68 = vld [vmem:[#allocation5 + $0x60] sm:$0xff]
    %v69 = vld [vmem:[#allocation5 + $0x68] sm:$0xff]
    %v70 = vld [vmem:[#allocation5 + $0x70] sm:$0xff]
    %v71 = vld [vmem:[#allocation5 + $0x78] sm:$0xff]
    %72 = vmatprep.subr.mxu0 0.0
    %73 = vmatpush1.msra.mxu0 %v56
    %74 = vmatprep.subr.mxu0 0.0
    %75 = vmatpush1.msra.mxu0 %v57
    %76 = vmatprep.subr.mxu0 0.0
    %77 = vmatpush1.msra.mxu0 %v58
    %78 = vmatprep.subr.mxu0 0.0
    %79 = vmatpush1.msra.mxu0 %v59
    %80 = vmatprep.subr.mxu0 0.0
    %81 = vmatpush1.msra.mxu0 %v60
    %82 = vmatprep.subr.mxu0 0.0
    %83 = vmatpush1.msra.mxu0 %v61
    %84 = vmatprep.subr.mxu0 0.0
    %85 = vmatpush1.msra.mxu0 %v62
    %86 = vmatprep.subr.mxu0 0.0
    %87 = vmatpush1.msra.mxu0 %v63
    %88 = vmatprep.subr.mxu0 0.0
    %89 = vmatpush1.msra.mxu0 %v64
    %90 = vmatprep.subr.mxu0 0.0
    %91 = vmatpush1.msra.mxu0 %v65
    %92 = vmatprep.subr.mxu0 0.0
    %93 = vmatpush1.msra.mxu0 %v66
    %94 = vmatprep.subr.mxu0 0.0
    %95 = vmatpush1.msra.mxu0 %v67
    %96 = vmatprep.subr.mxu0 0.0
    %97 = vmatpush1.msra.mxu0 %v68
    %98 = vmatprep.subr.mxu0 0.0
    %99 = vmatpush1.msra.mxu0 %v69
    %100 = vmatprep.subr.mxu0 0.0
    %101 = vmatpush1.msra.mxu0 %v70
    %102 = vmatprep.subr.mxu0 0.0
    %103 = vmatpush1.msra.mxu0 %v71
    %104 = vmatprep.subr.mxu0 0.0
    %105 = vmatpush1.msra.mxu0 0.0
    %106 = vmatprep.subr.mxu0 0.0
    %107 = vmatpush1.msra.mxu0 0.0
    %108 = vmatprep.subr.mxu0 0.0
    %109 = vmatpush1.msra.mxu0 0.0
    %110 = vmatprep.subr.mxu0 0.0
    %111 = vmatpush1.msra.mxu0 0.0
    %112 = vmatprep.subr.mxu0 0.0
    %113 = vmatpush1.msra.mxu0 0.0
    %114 = vmatprep.subr.mxu0 0.0
    %115 = vmatpush1.msra.mxu0 0.0
    %116 = vmatprep.subr.mxu0 0.0
    %117 = vmatpush1.msra.mxu0 0.0
    %118 = vmatprep.subr.mxu0 0.0
    %119 = vmatpush1.msra.mxu0 0.0
    %120 = vmatprep.subr.mxu0 0.0
    %121 = vmatpush1.msra.mxu0 0.0
    %122 = vmatprep.subr.mxu0 0.0
    %123 = vmatpush1.msra.mxu0 0.0
    %124 = vmatprep.subr.mxu0 0.0
    %125 = vmatpush1.msra.mxu0 0.0
    %126 = vmatprep.subr.mxu0 0.0
    %127 = vmatpush1.msra.mxu0 0.0
    %128 = vmatprep.subr.mxu0 0.0
    %129 = vmatpush1.msra.mxu0 0.0
    %130 = vmatprep.subr.mxu0 0.0
    %131 = vmatpush1.msra.mxu0 0.0
    %132 = vmatprep.subr.mxu0 0.0
    %133 = vmatpush1.msra.mxu0 0.0
    %134 = vmatprep.subr.mxu0 0.0
    %135 = vmatpush1.msra.mxu0 0.0
    %136 = vmatprep.mubr.f32.mxu0 0.0
    %137 = vmatmul.mubr.f32.gmra.mrb[0].mxu0 %v40
    %v138 = vpop.f32.mrb[0].mxu0
    %v139 = vadd.f32 0.0, %v138
    %v140 = vpop.f32.mrb[0].mxu0
    %141 = vmatprep.mubr.f32.mxu0 0.0
    %142 = vmatmul.mubr.f32.gmra.mrb[0].mxu0 %v41
    %v143 = vpop.f32.mrb[0].mxu0
    %v144 = vadd.f32 0.0, %v143
    %v145 = vpop.f32.mrb[0].mxu0
    %146 = vmatprep.mubr.f32.mxu0 0.0
    %147 = vmatmul.mubr.f32.gmra.mrb[0].mxu0 %v42
    %v148 = vpop.f32.mrb[0].mxu0
    %v149 = vadd.f32 0.0, %v148
    %v150 = vpop.f32.mrb[0].mxu0
    %151 = vmatprep.mubr.f32.mxu0 0.0
    %152 = vmatmul.mubr.f32.gmra.mrb[0].mxu0 %v43
    %v153 = vpop.f32.mrb[0].mxu0
    %v154 = vadd.f32 0.0, %v153
    %v155 = vpop.f32.mrb[0].mxu0
    %156 = vmatprep.mubr.f32.mxu0 0.0
    %157 = vmatmul.mubr.f32.gmra.mrb[0].mxu0 %v44
    %v158 = vpop.f32.mrb[0].mxu0
    %v159 = vadd.f32 0.0, %v158
    %v160 = vpop.f32.mrb[0].mxu0
    %161 = vmatprep.mubr.f32.mxu0 0.0
    %162 = vmatmul.mubr.f32.gmra.mrb[0].mxu0 %v45
    %v163 = vpop.f32.mrb[0].mxu0
    %v164 = vadd.f32 0.0, %v163
    %v165 = vpop.f32.mrb[0].mxu0
    %166 = vmatprep.mubr.f32.mxu0 0.0
    %167 = vmatmul.mubr.f32.gmra.mrb[0].mxu0 %v46
    %v168 = vpop.f32.mrb[0].mxu0
    %v169 = vadd.f32 0.0, %v168
    %v170 = vpop.f32.mrb[0].mxu0
    %171 = vmatprep.mubr.f32.mxu0 0.0
    %172 = vmatmul.mubr.f32.gmra.mrb[0].mxu0 %v47
    %v173 = vpop.f32.mrb[0].mxu0
    %v174 = vadd.f32 0.0, %v173
    %v175 = vpop.f32.mrb[0].mxu0
    %176 = vmatprep.mubr.f32.mxu0 0.0
    %177 = vmatmul.mubr.f32.gmra.mrb[0].mxu0 %v48
    %v178 = vpop.f32.mrb[0].mxu0
    %v179 = vadd.f32 0.0, %v178
    %v180 = vpop.f32.mrb[0].mxu0
    %181 = vmatprep.mubr.f32.mxu0 0.0
    %182 = vmatmul.mubr.f32.gmra.mrb[0].mxu0 %v49
    %v183 = vpop.f32.mrb[0].mxu0
    %v184 = vadd.f32 0.0, %v183
    %v185 = vpop.f32.mrb[0].mxu0
    %186 = vmatprep.mubr.f32.mxu0 0.0
    %187 = vmatmul.mubr.f32.gmra.mrb[0].mxu0 %v50
    %v188 = vpop.f32.mrb[0].mxu0
    %v189 = vadd.f32 0.0, %v188
    %v190 = vpop.f32.mrb[0].mxu0
    %191 = vmatprep.mubr.f32.mxu0 0.0
    %192 = vmatmul.mubr.f32.gmra.mrb[0].mxu0 %v51
    %v193 = vpop.f32.mrb[0].mxu0
    %v194 = vadd.f32 0.0, %v193
    %v195 = vpop.f32.mrb[0].mxu0
    %196 = vmatprep.mubr.f32.mxu0 0.0
    %197 = vmatmul.mubr.f32.gmra.mrb[0].mxu0 %v52
    %v198 = vpop.f32.mrb[0].mxu0
    %v199 = vadd.f32 0.0, %v198
    %v200 = vpop.f32.mrb[0].mxu0
    %201 = vmatprep.mubr.f32.mxu0 0.0
    %202 = vmatmul.mubr.f32.gmra.mrb[0].mxu0 %v53
    %v203 = vpop.f32.mrb[0].mxu0
    %v204 = vadd.f32 0.0, %v203
    %v205 = vpop.f32.mrb[0].mxu0
    %206 = vmatprep.mubr.f32.mxu0 0.0
    %207 = vmatmul.mubr.f32.gmra.mrb[0].mxu0 %v54
    %v208 = vpop.f32.mrb[0].mxu0
    %v209 = vadd.f32 0.0, %v208
    %v210 = vpop.f32.mrb[0].mxu0
    %211 = vmatprep.mubr.f32.mxu0 0.0
    %212 = vmatmul.mubr.f32.gmra.mrb[0].mxu0 %v55
    %v213 = vpop.f32.mrb[0].mxu0
    %v214 = vadd.f32 0.0, %v213
    %v215 = vpop.f32.mrb[0].mxu0
    %216 = vdwg.mxu0
    %217 = vst [vmem:[#allocation7] sm:$0xff] %v139
    %218 = vst [vmem:[#allocation7 + $0x8] sm:$0xff] %v144
    %219 = vst [vmem:[#allocation7 + $0x10] sm:$0xff] %v149
    %220 = vst [vmem:[#allocation7 + $0x18] sm:$0xff] %v154
    %221 = vst [vmem:[#allocation7 + $0x20] sm:$0xff] %v159
    %222 = vst [vmem:[#allocation7 + $0x28] sm:$0xff] %v164
    %223 = vst [vmem:[#allocation7 + $0x30] sm:$0xff] %v169
    %224 = vst [vmem:[#allocation7 + $0x38] sm:$0xff] %v174
    %225 = vst [vmem:[#allocation7 + $0x40] sm:$0xff] %v179
    %226 = vst [vmem:[#allocation7 + $0x48] sm:$0xff] %v184
    %227 = vst [vmem:[#allocation7 + $0x50] sm:$0xff] %v189
    %228 = vst [vmem:[#allocation7 + $0x58] sm:$0xff] %v194
    %229 = vst [vmem:[#allocation7 + $0x60] sm:$0xff] %v199
    %230 = vst [vmem:[#allocation7 + $0x68] sm:$0xff] %v204
    %231 = vst [vmem:[#allocation7 + $0x70] sm:$0xff] %v209
    %232 = vst [vmem:[#allocation7 + $0x78] sm:$0xff] %v214
    // Predicated region
    $region18: #{tpu_custom_call.1} parent=1 // pred_check
      _
    $region19: #{tpu_custom_call.1} parent=1 // pred_check_branch
      %234 = sbr.rel (0) target = $region21
    $region20: #{tpu_custom_call.1} parent=1 // pred_region
      %s236 = ssub.s32 2048, 2048
      %237 = vsyncadd [#allocation4], %s236
      %s238 = sshll.u32 [#allocation7], 4
      %s239 = int_to_ptr.vmem [resolvable:$true] %s238
      %244 = dma.vmem_to_hbm [thread:$0]  %s239, 2048, %s2, [#allocation4], 128, 128, 8
    $region21: #{tpu_custom_call.1} parent=1 // pred_fallthru
      _
    // Predicated region
    $region22: #{tpu_custom_call.1} parent=1 // pred_check
      _
    $region23: #{tpu_custom_call.1} parent=1 // pred_check_branch
      %246 = sbr.rel (0) target = $region25
    $region24: #{tpu_custom_call.1} parent=1 // pred_region
      %247 = dma.done [#allocation4], 2048
    $region25: #{tpu_custom_call.1} parent=1 // pred_fallthru
      _
    %248 = vsyncpa [#allocation3], 1
    %249 = vsyncpa [#allocation6], 1
    %250 = vsyncpa [#allocation4], 1

</llo_original>
